<compile_context>
chip_gen: v6e
topology: v6e:2x2x1
jax: 0.10.0
libtpu: 0.0.40
codegen_flags: <defaults>
</compile_context>

<pallas_src>
import jax
import jax.numpy as jnp
import numpy as np
from jax.experimental import pallas as pl
from jax.experimental.pallas import tpu as pltpu


def _tree_sum(terms):
    """Log-depth sum of a list of same-shaped arrays (independent FMA chains)."""
    terms = list(terms)
    while len(terms) > 1:
        nxt = []
        for i in range(0, len(terms) - 1, 2):
            nxt.append(terms[i] + terms[i + 1])
        if len(terms) % 2:
            nxt.append(terms[-1])
        terms = nxt
    return terms[0]


def _make_bag_kernel(n_models: int, cin: int, use_mxu: bool):
    """Kernel body.  Grid = (B, t_tiles); the bag (N) reduction is in-kernel."""

    def bag_kernel(wm_ref, x_ref, o_ref):
        x = x_ref[...]                         # (Cin, TT) — batch dim squeezed
        terms = []
        for n in range(n_models):              # small, static → unrolled
            wm = wm_ref[n]                      # (SC, Cin) weight/norm-folded
            if use_mxu:
                # MXU path for real channel counts.  bf16 operands (MXU-native,
                # halves operand traffic); f32 accumulation.  Kernel stays
                # memory-bound, so this is a traffic win, not a compute win.
                terms.append(jnp.dot(wm.astype(jnp.bfloat16),
                                     x.astype(jnp.bfloat16),
                                     preferred_element_type=jnp.float32))
            else:
                # Tiny contraction (Cin << MXU dims): independent broadcast
                # FMAs on the VPU, tree-summed below (no serial dep chain).
                for c in range(cin):
                    terms.append(wm[:, c:c + 1] * x[c:c + 1, :])
        acc = _tree_sum(terms)                  # f32 accumulator in vregs
        o_ref[...] = acc.astype(o_ref.dtype)    # single store per tile

    return bag_kernel


def _pick_time_tile(T: int, cin: int, sc: int, budget_bytes: int,
                    max_lanes: int = 256 * 1024):
    """Pick a lane-aligned time tile; prefer one that divides T (no padding)."""
    if T <= 128:
        return T, T
    per_lane = 2 * (cin + sc) * 4              # double-buffered in+out tiles
    tt = min(T, max_lanes, max(128, budget_bytes // per_lane))
    tt = max(128, (tt // 128) * 128)
    cand = tt
    while cand >= 128 and T % cand != 0:
        cand -= 128
    if cand >= 128:
        return cand, T                          # exact divisor, no padding pass
    t_pad = ((T + tt - 1) // tt) * tt           # fallback: one pad pass
    return tt, t_pad


def bag_of_models_apply(x, sub_model_w, weights):
    """Weighted-average bag combination.

    Args:
      x:           (B, C_in, T) mixture (PyTorch NCT convention).
      sub_model_w: (N, S*C_in, C_in) per-model synthetic demixing matrices.
      weights:     (N, S) per-model per-source weights.

    Returns:
      (B, S, C_in, T) estimates, in x.dtype.
    """
    B, Cin, T = x.shape
    N, SC, Cin2 = sub_model_w.shape
    assert Cin == Cin2
    S = weights.shape[1]
    C = SC // S
    assert S * C == SC and weights.shape[0] == N

    # --- Host-side parameter folding: W_eff[n] = W_n * weight_n / totals.
    # (Zero per-source total weight -> inf/nan here, same hazard as PyTorch.)
    wexp = jnp.repeat(weights.astype(jnp.float32), C, axis=1)           # (N, SC)
    inv_tot = 1.0 / jnp.repeat(jnp.sum(weights.astype(jnp.float32), axis=0), C)
    w_eff = (sub_model_w.astype(jnp.float32)
             * wexp[:, :, None] * inv_tot[None, :, None])               # (N, SC, Cin)

    # --- Generation-aware VMEM budget and time-tile size.
    try:
        vmem_cap = int(pltpu.get_tpu_info().vmem_capacity_bytes)
    except Exception:
        vmem_cap = 64 * 1024 * 1024             # conservative (v7x-sized) fallback
    tile_budget = min(int(0.6 * vmem_cap), 96 * 1024 * 1024)
    TT, T_pad = _pick_time_tile(T, Cin, SC, tile_budget)

    if T_pad != T:
        # Rare fallback (T not a multiple of 128): zero-pad; linear map, so
        # padded columns are simply dropped below.
        x = jnp.pad(x, ((0, 0), (0, 0), (0, T_pad - T)))
    n_t_tiles = T_pad // TT

    use_mxu = Cin >= 16
    kernel = _make_bag_kernel(N, Cin, use_mxu)

    # VMEM request: double-buffered in/out tiles + resident folded weights,
    # plus headroom; capped below physical capacity.
    need = 2 * (Cin + SC) * TT * 4 + N * SC * Cin * 4
    vmem_bytes = int(min(max(int(need * 1.25) + (1 << 20), 1 << 20),
                         int(0.85 * vmem_cap)))

    out = pl.pallas_call(
        kernel,
        out_shape=jax.ShapeDtypeStruct((B, SC, T_pad), x.dtype),
        grid_spec=pltpu.PrefetchScalarGridSpec(
            num_scalar_prefetch=0,
            grid=(B, n_t_tiles),                    # no reduction axis in grid
            in_specs=[
                # All N folded matrices as one tiny resident block (one DMA).
                pl.BlockSpec((N, SC, Cin), lambda b, t: (0, 0, 0)),
                # Native-layout mixture tile.
                pl.BlockSpec((pl.Squeezed(), Cin, TT), lambda b, t: (b, 0, t)),
            ],
            # Each output block is written exactly once.
            out_specs=pl.BlockSpec((pl.Squeezed(), SC, TT),
                                   lambda b, t: (b, 0, t)),
        ),
        compiler_params=pltpu.CompilerParams(
            dimension_semantics=("parallel", "parallel"),
            vmem_limit_bytes=vmem_bytes),
    )(w_eff, x)

    if T_pad != T:
        out = out[:, :, :T]
    # (B, SC, T) -> (B, S, C, T) is a free reshape.
    return out.reshape(B, S, C, T)


def _reference(x, sub_model_w, weights):
    """Pure-JAX reference of apply_model's BagOfModels combination."""
    B, Cin, T = x.shape
    N, SC, _ = sub_model_w.shape
    S = weights.shape[1]
    C = SC // S
    outs = jnp.einsum("noc,bct->nbot", sub_model_w, x,
                      precision=jax.lax.Precision.HIGHEST)    # (N, B, SC, T)
    wexp = jnp.repeat(weights, C, axis=1)                     # (N, SC)
    weighted = outs * wexp[:, None, :, None]
    totals = jnp.repeat(jnp.sum(weights, axis=0), C)          # (SC,)
    est = jnp.sum(weighted, axis=0) / totals[None, :, None]   # (B, SC, T)
    return est.reshape(B, S, C, T)


if __name__ == "__main__":
    # Small, deterministic setup: 3 sub-models, 4 sources (drums/bass/other/
    # vocals), stereo audio (C_in = 2), batch = 2, T = 2048 samples.
    key = jax.random.PRNGKey(0)
    k_x, k_w = jax.random.split(key)

    N, S, Cin, B, T = 3, 4, 2, 2, 2048
    SC = S * Cin

    x = jax.random.normal(k_x, (B, Cin, T), dtype=jnp.float32)
    sub_model_w = jax.random.normal(k_w, (N, SC, Cin), dtype=jnp.float32) * 0.1
    weights = jnp.array(
        [[1.0, 1.0, 1.0, 1.0],
         [0.5, 1.5, 2.0, 1.0],
         [2.0, 0.5, 1.0, 3.0]], dtype=jnp.float32)            # (N, S)

    est = jax.block_until_ready(bag_of_models_apply(x, sub_model_w, weights))
    ref = jax.block_until_ready(_reference(x, sub_model_w, weights))

    np.testing.assert_allclose(np.asarray(est), np.asarray(ref),
                               rtol=1e-5, atol=1e-5)
    assert est.shape == (B, S, Cin, T)
    assert est.dtype == x.dtype

    print("KERNEL_OK")
</pallas_src>

<mosaic_0001>
module attributes {stable_mosaic.version = 11 : i64} {
  func.func @bag_kernel(%arg0: i32, %arg1: i32, %arg2: memref<3x8x2xf32, #tpu.memory_space<vmem>>, %arg3: memref<1x2x2048xf32, #tpu.memory_space<vmem>>, %arg4: memref<1x8x2048xf32, #tpu.memory_space<vmem>>) attributes {dimension_semantics = [#tpu.dimension_semantics<parallel>, #tpu.dimension_semantics<parallel>], iteration_bounds = array<i64: 2, 1>, scalar_prefetch = 0 : i64, scratch_operands = 0 : i64, tpu.core_type = #tpu.core_type<tc>, window_params = [{pipeline_mode = #tpu.pipeline_mode<synchronous>, transform_indices = @transform_0, window_bounds = array<i64: 3, 8, 2>}, {transform_indices = @transform_1, window_bounds = array<i64: 1, 2, 2048>}, {transform_indices = @transform_2, window_bounds = array<i64: 1, 8, 2048>}]} {
    %c0 = arith.constant 0 : index
    %c0_0 = arith.constant 0 : index
    %c0_1 = arith.constant 0 : index
    %0 = vector.load %arg3[%c0, %c0_0, %c0_1] : memref<1x2x2048xf32, #tpu.memory_space<vmem>>, vector<1x2x2048xf32>
    %1 = vector.shape_cast %0 : vector<1x2x2048xf32> to vector<2x2048xf32>
    %c0_2 = arith.constant 0 : index
    %c0_3 = arith.constant 0 : index
    %c0_4 = arith.constant 0 : index
    %2 = vector.load %arg2[%c0_2, %c0_3, %c0_4] : memref<3x8x2xf32, #tpu.memory_space<vmem>>, vector<1x8x2xf32>
    %3 = vector.shape_cast %2 : vector<1x8x2xf32> to vector<8x2xf32>
    %4 = vector.extract_strided_slice %3 {offsets = [0, 0], sizes = [8, 1], strides = [1, 1]} : vector<8x2xf32> to vector<8x1xf32>
    %5 = vector.extract_strided_slice %1 {offsets = [0, 0], sizes = [1, 2048], strides = [1, 1]} : vector<2x2048xf32> to vector<1x2048xf32>
    %6 = vector.broadcast %4 : vector<8x1xf32> to vector<8x2048xf32>
    %7 = vector.broadcast %5 : vector<1x2048xf32> to vector<8x2048xf32>
    %8 = arith.mulf %6, %7 : vector<8x2048xf32>
    %9 = vector.extract_strided_slice %3 {offsets = [0, 1], sizes = [8, 1], strides = [1, 1]} : vector<8x2xf32> to vector<8x1xf32>
    %10 = vector.extract_strided_slice %1 {offsets = [1, 0], sizes = [1, 2048], strides = [1, 1]} : vector<2x2048xf32> to vector<1x2048xf32>
    %11 = vector.broadcast %9 : vector<8x1xf32> to vector<8x2048xf32>
    %12 = vector.broadcast %10 : vector<1x2048xf32> to vector<8x2048xf32>
    %13 = arith.mulf %11, %12 : vector<8x2048xf32>
    %c1 = arith.constant 1 : index
    %c0_5 = arith.constant 0 : index
    %c0_6 = arith.constant 0 : index
    %14 = vector.load %arg2[%c1, %c0_5, %c0_6] : memref<3x8x2xf32, #tpu.memory_space<vmem>>, vector<1x8x2xf32>
    %15 = vector.shape_cast %14 : vector<1x8x2xf32> to vector<8x2xf32>
    %16 = vector.extract_strided_slice %15 {offsets = [0, 0], sizes = [8, 1], strides = [1, 1]} : vector<8x2xf32> to vector<8x1xf32>
    %17 = vector.extract_strided_slice %1 {offsets = [0, 0], sizes = [1, 2048], strides = [1, 1]} : vector<2x2048xf32> to vector<1x2048xf32>
    %18 = vector.broadcast %16 : vector<8x1xf32> to vector<8x2048xf32>
    %19 = vector.broadcast %17 : vector<1x2048xf32> to vector<8x2048xf32>
    %20 = arith.mulf %18, %19 : vector<8x2048xf32>
    %21 = vector.extract_strided_slice %15 {offsets = [0, 1], sizes = [8, 1], strides = [1, 1]} : vector<8x2xf32> to vector<8x1xf32>
    %22 = vector.extract_strided_slice %1 {offsets = [1, 0], sizes = [1, 2048], strides = [1, 1]} : vector<2x2048xf32> to vector<1x2048xf32>
    %23 = vector.broadcast %21 : vector<8x1xf32> to vector<8x2048xf32>
    %24 = vector.broadcast %22 : vector<1x2048xf32> to vector<8x2048xf32>
    %25 = arith.mulf %23, %24 : vector<8x2048xf32>
    %c2 = arith.constant 2 : index
    %c0_7 = arith.constant 0 : index
    %c0_8 = arith.constant 0 : index
    %26 = vector.load %arg2[%c2, %c0_7, %c0_8] : memref<3x8x2xf32, #tpu.memory_space<vmem>>, vector<1x8x2xf32>
    %27 = vector.shape_cast %26 : vector<1x8x2xf32> to vector<8x2xf32>
    %28 = vector.extract_strided_slice %27 {offsets = [0, 0], sizes = [8, 1], strides = [1, 1]} : vector<8x2xf32> to vector<8x1xf32>
    %29 = vector.extract_strided_slice %1 {offsets = [0, 0], sizes = [1, 2048], strides = [1, 1]} : vector<2x2048xf32> to vector<1x2048xf32>
    %30 = vector.broadcast %28 : vector<8x1xf32> to vector<8x2048xf32>
    %31 = vector.broadcast %29 : vector<1x2048xf32> to vector<8x2048xf32>
    %32 = arith.mulf %30, %31 : vector<8x2048xf32>
    %33 = vector.extract_strided_slice %27 {offsets = [0, 1], sizes = [8, 1], strides = [1, 1]} : vector<8x2xf32> to vector<8x1xf32>
    %34 = vector.extract_strided_slice %1 {offsets = [1, 0], sizes = [1, 2048], strides = [1, 1]} : vector<2x2048xf32> to vector<1x2048xf32>
    %35 = vector.broadcast %33 : vector<8x1xf32> to vector<8x2048xf32>
    %36 = vector.broadcast %34 : vector<1x2048xf32> to vector<8x2048xf32>
    %37 = arith.mulf %35, %36 : vector<8x2048xf32>
    %38 = arith.addf %8, %13 : vector<8x2048xf32>
    %39 = arith.addf %20, %25 : vector<8x2048xf32>
    %40 = arith.addf %32, %37 : vector<8x2048xf32>
    %41 = arith.addf %38, %39 : vector<8x2048xf32>
    %42 = arith.addf %41, %40 : vector<8x2048xf32>
    %c0_9 = arith.constant 0 : index
    %c0_10 = arith.constant 0 : index
    %c0_11 = arith.constant 0 : index
    %43 = vector.load %arg4[%c0_9, %c0_10, %c0_11] : memref<1x8x2048xf32, #tpu.memory_space<vmem>>, vector<1x8x2048xf32>
    %44 = vector.shape_cast %43 : vector<1x8x2048xf32> to vector<8x2048xf32>
    %45 = vector.shape_cast %42 : vector<8x2048xf32> to vector<1x8x2048xf32>
    tpu.vector_store %arg4[%c0_9, %c0_10, %c0_11], %45 {strides = array<i32>} : memref<1x8x2048xf32, #tpu.memory_space<vmem>>, vector<1x8x2048xf32>,
    return
  }
  func.func @transform_0(%arg0: i32, %arg1: i32) -> (i32, i32, i32) {
    %c0_i32 = arith.constant 0 : i32
    %c0_i32_0 = arith.constant 0 : i32
    %c0_i32_1 = arith.constant 0 : i32
    %c0_i32_2 = arith.constant 0 : i32
    return %c0_i32, %c0_i32_0, %c0_i32_1 : i32, i32, i32
  }
  func.func @transform_1(%arg0: i32, %arg1: i32) -> (i32, i32, i32) {
    %c0_i32 = arith.constant 0 : i32
    %c0_i32_0 = arith.constant 0 : i32
    return %arg0, %c0_i32, %arg1 : i32, i32, i32
  }
  func.func @transform_2(%arg0: i32, %arg1: i32) -> (i32, i32, i32) {
    %c0_i32 = arith.constant 0 : i32
    %c0_i32_0 = arith.constant 0 : i32
    return %arg0, %c0_i32, %arg1 : i32, i32, i32
  }
}

</mosaic_0001>

<llo_original>
// kernel: tpu_custom_call.1
$region0: #{tpu_custom_call.1}
  #allocation0 [shape = 'u32[]', space=smem, size = 0x4, offset = 0x4, fixed_abs, tag = 'smem constant byte address 0x4 - core index']
  #allocation1 [shape = 'u32[144,128]{1,0:T(1,128)}', space=vmem, size = 0x12000, scoped, tag = 'internal scratch']
  %s0 = inlined_call_operand.vmem [shape: f32[3,8,2], index: 0, kind: input, shape index: {}]
  %s1 = inlined_call_operand.hbm [shape: f32[2,2,2048], index: 1, kind: input, shape index: {}]
  %s2 = inlined_call_operand.hbm [shape: f32[2,8,2048], index: 2, kind: output, shape index: {}]
  %s3 = sld [smem:[#allocation0]]
  $region45: #{tpu_custom_call.1} parent=0
    _
  %s5 = ssub.s32 1, %s3
  %s6 = scalar_select 0, %s5, %s3
  $region1: #{tpu_custom_call.1} parent=0
    #allocation2 [shape = 'u8[32768]{0}', space=vmem, size = 0x8000, scoped, tag = 'input window, operand 1']
    #allocation3 [shape = 's32[2]{0}', space=sflag, size = 0x8, scoped, tag = 'scoped memory for tpu_custom_call.1']
    #allocation4 [shape = 's32[2]{0}', space=sflag, size = 0x8, scoped, tag = 'scoped memory for tpu_custom_call.1']
    #allocation5 [shape = 'u8[131072]{0}', space=vmem, size = 0x20000, scoped, tag = 'output window, operand 0']
    %7 = vsyncpa [#allocation3], 0
    %s8 = scalar_lea.sflag [#allocation3], 1
    %9 = vsyncpa %s8, 0
    %10 = vsyncpa [#allocation4], 0
    %s11 = scalar_lea.sflag [#allocation4], 1
    %12 = vsyncpa %s11, 0
    loop: start=0, step=1, limit=4
    $region2: #{tpu_custom_call.1} parent=1 // loop_pre_header
      _
    $region3: #{tpu_custom_call.1} parent=1 // loop_header
      %s14 = sphi 0, %s18
      %p15 = scmp.ge.s32.totalorder %s14, 4
      %s21 = sphi 0, %s33
      %s22 = sphi 0, %s29
      %s23 = sphi 0, %s21
      %s24 = sphi 0, %s22
      %s25 = sphi 0, %s23
      %s26 = sphi 0, %s24
      %s34 = sphi 0, %s34
      %s36 = sphi 0, %s34
      %s37 = sphi 0, %s36
      %s51 = sphi 0, %s37
      %s59 = sphi 0, %s61
      %s62 = sphi 0, %s59
      %s63 = sphi 0, %s62
      %s79 = sphi 0, %s63
      %s87 = sphi 0, %s89
      %s90 = sphi 0, %s87
      %s91 = sphi 0, %s90
      %s107 = sphi 0, %s91
    $region4: #{tpu_custom_call.1} parent=1 // loop_header_branch
      %17 = sbr.rel (%p15) target = $region8
    $region5: #{tpu_custom_call.1} parent=1 // loop_body
      %s19 = ssub.s32 %s14, 1
      %s20 = ssub.s32 %s14, 2
      %s27 = sadd.s32 1, %s22
      %p28 = scmp.ge.s32.totalorder %s27, 1
      %s29 = scalar_select %p28, 0, %s27
      %s30 = sadd.s32 1, %s21
      %s31 = scalar_select %p28, %s30, %s21
      %p32 = scmp.ge.s32.totalorder %s31, 2
      %s33 = scalar_select %p32, 0, %s31
      %s35 = sadd.s32 %s34, 1
      %p38 = scmp.eq.s32.totalorder %s14, 1
      %p39 = scmp.ne.s32.totalorder %s34, %s36
      %p40 = scmp.eq.s32.totalorder %s14, 0
      %p41 = por %p39, %p40
      %p42 = scmp.ne.s32.totalorder %s34, %s36
      %p43 = scmp.eq.s32.totalorder %s19, 1
      %p44 = por %p42, %p43
      %p45 = scmp.ne.s32.totalorder %s36, %s37
      %p46 = scmp.eq.s32.totalorder %s19, 0
      %p47 = por %p45, %p46
      %p48 = scmp.ne.s32.totalorder %s36, %s37
      %p49 = scmp.eq.s32.totalorder %s20, 1
      %p50 = por %p48, %p49
      %p52 = scmp.ne.s32.totalorder %s37, %s51
      %p53 = scmp.eq.s32.totalorder %s20, 0
      %p54 = por %p52, %p53
      %s55 = ssub.s32 %s21, %s33
      %s56 = ssub.s32 %s22, %s29
      %s57 = sor.u32 %s55, %s56
      %p58 = scmp.eq.s32.totalorder %s57, 0
      %s60 = sadd.s32 %s59, 1
      %s61 = scalar_select %p58, %s59, %s60
      %p64 = pneg %p58
      %p65 = scmp.eq.s32.totalorder %s14, 1
      %p66 = por %p64, %p65
      %p67 = scmp.ne.s32.totalorder %s59, %s62
      %p68 = scmp.eq.s32.totalorder %s14, 0
      %p69 = por %p67, %p68
      %p70 = scmp.ne.s32.totalorder %s59, %s62
      %p71 = scmp.eq.s32.totalorder %s19, 1
      %p72 = por %p70, %p71
      %p73 = scmp.ne.s32.totalorder %s62, %s63
      %p74 = scmp.eq.s32.totalorder %s19, 0
      %p75 = por %p73, %p74
      %p76 = scmp.ne.s32.totalorder %s62, %s63
      %p77 = scmp.eq.s32.totalorder %s20, 1
      %p78 = por %p76, %p77
      %p80 = scmp.ne.s32.totalorder %s63, %s79
      %p81 = scmp.eq.s32.totalorder %s20, 0
      %p82 = por %p80, %p81
      %s83 = ssub.s32 %s21, %s33
      %s84 = ssub.s32 %s22, %s29
      %s85 = sor.u32 %s83, %s84
      %p86 = scmp.eq.s32.totalorder %s85, 0
      %s88 = sadd.s32 %s87, 1
      %s89 = scalar_select %p86, %s87, %s88
      %p92 = pneg %p86
      %p93 = scmp.eq.s32.totalorder %s14, 1
      %p94 = por %p92, %p93
      %p95 = scmp.ne.s32.totalorder %s87, %s90
      %p96 = scmp.eq.s32.totalorder %s14, 0
      %p97 = por %p95, %p96
      %p98 = scmp.ne.s32.totalorder %s87, %s90
      %p99 = scmp.eq.s32.totalorder %s19, 1
      %p100 = por %p98, %p99
      %p101 = scmp.ne.s32.totalorder %s90, %s91
      %p102 = scmp.eq.s32.totalorder %s19, 0
      %p103 = por %p101, %p102
      %p104 = scmp.ne.s32.totalorder %s90, %s91
      %p105 = scmp.eq.s32.totalorder %s20, 1
      %p106 = por %p104, %p105
      %p108 = scmp.ne.s32.totalorder %s91, %s107
      %p109 = scmp.eq.s32.totalorder %s20, 0
      %p110 = por %p108, %p109
      %p111 = scmp.le.s32.totalorder 1, %s14
      %p112 = scmp.lt.s32.totalorder %s14, 3
      %p113 = pnand %p111, %p112
      %p114 = pneg %p113
      // Predicated region
      $region9: #{tpu_custom_call.1} parent=5 // pred_check
        _
      $region10: #{tpu_custom_call.1} parent=5 // pred_check_branch
        %116 = sbr.rel (%p113) target = $region12
      $region11: #{tpu_custom_call.1} parent=5 // pred_region
        %s117 = ssub.s32 %s14, 1
        // Predicated region
        $region13: #{tpu_custom_call.1} parent=11 // pred_check
          %p118 = pneg %p47
        $region14: #{tpu_custom_call.1} parent=11 // pred_check_branch
          %120 = sbr.rel (%p118) target = $region16
        $region15: #{tpu_custom_call.1} parent=11 // pred_region
          _
        $region16: #{tpu_custom_call.1} parent=11 // pred_fallthru
          _
      $region12: #{tpu_custom_call.1} parent=5 // pred_fallthru
        _
      %p121 = scmp.lt.s32.totalorder %s14, 2
      // Predicated region
      $region17: #{tpu_custom_call.1} parent=5 // pred_check
        %p122 = pneg %p121
      $region18: #{tpu_custom_call.1} parent=5 // pred_check_branch
        %124 = sbr.rel (%p122) target = $region20
      $region19: #{tpu_custom_call.1} parent=5 // pred_region
        // Predicated region
        $region21: #{tpu_custom_call.1} parent=19 // pred_check
          %p125 = pneg %p69
        $region22: #{tpu_custom_call.1} parent=19 // pred_check_branch
          %127 = sbr.rel (%p125) target = $region24
        $region23: #{tpu_custom_call.1} parent=19 // pred_region
          %s128 = sand.u32 %s59, 1
          %s129 = scalar_lea.sflag [#allocation3], %s128
          %s130 = sand.u32 %s59, 1
          %s131 = smul.addr %s130, 32
          %s132 = scalar_lea.vmem [#allocation2], %s131
          %s133 = smul.u32 16, %s22
          %s135 = ssub.s32 512, 512
          %136 = vsyncadd %s129, %s135
          %s137 = smul.addr %s21, 16
          %s138 = sadd.s32 %s133, %s137
          %s139 = smul.addr %s138, 32
          %s140 = scalar_lea.hbm %s1, %s139
          %s142 = sshll.u32 %s132, 4
          %s143 = int_to_ptr.vmem [resolvable:$true] %s142
          %145 = dma.hbm_to_vmem [thread:$0]  %s140, 512, %s143, %s129
        $region24: #{tpu_custom_call.1} parent=19 // pred_fallthru
          _
      $region20: #{tpu_custom_call.1} parent=5 // pred_fallthru
        _
      %p146 = scmp.le.s32.totalorder 1, %s14
      %p147 = scmp.lt.s32.totalorder %s14, 3
      %p148 = pnand %p146, %p147
      %p149 = pneg %p148
      // Predicated region
      $region25: #{tpu_custom_call.1} parent=5 // pred_check
        _
      $region26: #{tpu_custom_call.1} parent=5 // pred_check_branch
        %151 = sbr.rel (%p148) target = $region28
      $region27: #{tpu_custom_call.1} parent=5 // pred_region
        %s152 = ssub.s32 %s14, 1
        %s153 = sand.u32 %s62, 1
        %s154 = scalar_lea.sflag [#allocation3], %s153
        %s155 = sand.u32 %s62, 1
        %s156 = smul.addr %s155, 32
        %s157 = scalar_lea.vmem [#allocation2], %s156
        // Predicated region
        $region29: #{tpu_custom_call.1} parent=27 // pred_check
          %p158 = pneg %p75
        $region30: #{tpu_custom_call.1} parent=27 // pred_check_branch
          %160 = sbr.rel (%p158) target = $region32
        $region31: #{tpu_custom_call.1} parent=27 // pred_region
          %161 = dma.done %s154, 512
        $region32: #{tpu_custom_call.1} parent=27 // pred_fallthru
          _
        %p162 = pneg %p47
        %p163 = pneg %p44
        %s164 = sand.u32 %s62, 1
        %s165 = scalar_lea.sflag [#allocation3], %s164
        %s166 = sand.u32 %s62, 1
        %s167 = smul.addr %s166, 32
        %s168 = scalar_lea.vmem [#allocation2], %s167
        %p169 = pneg %p75
        %p170 = pneg %p72
        %p171 = pneg %p103
        %p172 = pneg %p100
        %s173 = sand.u32 %s90, 1
        %s174 = scalar_lea.sflag [#allocation4], %s173
        %s175 = sand.u32 %s90, 1
        %s176 = smul.addr %s175, 128
        %s177 = scalar_lea.vmem [#allocation5], %s176
        %s178 = smul.u32 16, %s24
        %s179 = smul.u32 16, %s24
        %v180 = vld [vmem:[%s157] sm:$0xff]
        %v181 = vld [vmem:[%s157 + $0x8] sm:$0xff]
        %v182 = vld [vmem:[%s157 + $0x10] sm:$0xff]
        %v183 = vld [vmem:[%s157 + $0x18] sm:$0xff]
        %v184 = vld [vmem:[%s0] sm:$0xff]
        %186 = vset.pattern.permute.xlu0 0
        %187 = vperm.xlu0 %186, %v184
        %v188 = vpop.permute.xlu0 %187
        %v194 = vlaneseq
        %v195 = vshrl.u32 %v194, 7
        %v196 = vsub.s32 0, %v195
        %v197 = vrot.slane %v180, %v196
        %v198 = vlaneseq
        %v199 = vshrl.u32 %v198, 7
        %v200 = vsub.s32 2, %v199
        %v201 = vrot.slane %v180, %v200
        %v202 = vlaneseq
        %v203 = vshrl.u32 %v202, 7
        %v204 = vsub.s32 4, %v203
        %v205 = vrot.slane %v180, %v204
        %v206 = vlaneseq
        %v207 = vshrl.u32 %v206, 7
        %v208 = vsub.s32 6, %v207
        %v209 = vrot.slane %v180, %v208
        %v210 = vlaneseq
        %v211 = vshrl.u32 %v210, 7
        %v212 = vsub.s32 0, %v211
        %v213 = vrot.slane %v181, %v212
        %v214 = vlaneseq
        %v215 = vshrl.u32 %v214, 7
        %v216 = vsub.s32 2, %v215
        %v217 = vrot.slane %v181, %v216
        %v218 = vlaneseq
        %v219 = vshrl.u32 %v218, 7
        %v220 = vsub.s32 4, %v219
        %v221 = vrot.slane %v181, %v220
        %v222 = vlaneseq
        %v223 = vshrl.u32 %v222, 7
        %v224 = vsub.s32 6, %v223
        %v225 = vrot.slane %v181, %v224
        %v226 = vlaneseq
        %v227 = vshrl.u32 %v226, 7
        %v228 = vsub.s32 0, %v227
        %v229 = vrot.slane %v182, %v228
        %v230 = vlaneseq
        %v231 = vshrl.u32 %v230, 7
        %v232 = vsub.s32 2, %v231
        %v233 = vrot.slane %v182, %v232
        %v234 = vlaneseq
        %v235 = vshrl.u32 %v234, 7
        %v236 = vsub.s32 4, %v235
        %v237 = vrot.slane %v182, %v236
        %v238 = vlaneseq
        %v239 = vshrl.u32 %v238, 7
        %v240 = vsub.s32 6, %v239
        %v241 = vrot.slane %v182, %v240
        %v242 = vlaneseq
        %v243 = vshrl.u32 %v242, 7
        %v244 = vsub.s32 0, %v243
        %v245 = vrot.slane %v183, %v244
        %v246 = vlaneseq
        %v247 = vshrl.u32 %v246, 7
        %v248 = vsub.s32 2, %v247
        %v249 = vrot.slane %v183, %v248
        %v250 = vlaneseq
        %v251 = vshrl.u32 %v250, 7
        %v252 = vsub.s32 4, %v251
        %v253 = vrot.slane %v183, %v252
        %v254 = vlaneseq
        %v255 = vshrl.u32 %v254, 7
        %v256 = vsub.s32 6, %v255
        %v257 = vrot.slane %v183, %v256
        %v274 = vlaneseq
        %v275 = vshrl.u32 %v274, 7
        %v276 = vsub.s32 0, %v275
        %v277 = vrot.slane %v197, %v276
        %v278 = vlaneseq
        %v279 = vshrl.u32 %v278, 7
        %v280 = vsub.s32 0, %v279
        %v281 = vrot.slane %v201, %v280
        %v282 = vlaneseq
        %v283 = vshrl.u32 %v282, 7
        %v284 = vsub.s32 0, %v283
        %v285 = vrot.slane %v205, %v284
        %v286 = vlaneseq
        %v287 = vshrl.u32 %v286, 7
        %v288 = vsub.s32 0, %v287
        %v289 = vrot.slane %v209, %v288
        %v290 = vlaneseq
        %v291 = vshrl.u32 %v290, 7
        %v292 = vsub.s32 0, %v291
        %v293 = vrot.slane %v213, %v292
        %v294 = vlaneseq
        %v295 = vshrl.u32 %v294, 7
        %v296 = vsub.s32 0, %v295
        %v297 = vrot.slane %v217, %v296
        %v298 = vlaneseq
        %v299 = vshrl.u32 %v298, 7
        %v300 = vsub.s32 0, %v299
        %v301 = vrot.slane %v221, %v300
        %v302 = vlaneseq
        %v303 = vshrl.u32 %v302, 7
        %v304 = vsub.s32 0, %v303
        %v305 = vrot.slane %v225, %v304
        %v306 = vlaneseq
        %v307 = vshrl.u32 %v306, 7
        %v308 = vsub.s32 0, %v307
        %v309 = vrot.slane %v229, %v308
        %v310 = vlaneseq
        %v311 = vshrl.u32 %v310, 7
        %v312 = vsub.s32 0, %v311
        %v313 = vrot.slane %v233, %v312
        %v314 = vlaneseq
        %v315 = vshrl.u32 %v314, 7
        %v316 = vsub.s32 0, %v315
        %v317 = vrot.slane %v237, %v316
        %v318 = vlaneseq
        %v319 = vshrl.u32 %v318, 7
        %v320 = vsub.s32 0, %v319
        %v321 = vrot.slane %v241, %v320
        %v322 = vlaneseq
        %v323 = vshrl.u32 %v322, 7
        %v324 = vsub.s32 0, %v323
        %v325 = vrot.slane %v245, %v324
        %v326 = vlaneseq
        %v327 = vshrl.u32 %v326, 7
        %v328 = vsub.s32 0, %v327
        %v329 = vrot.slane %v249, %v328
        %v330 = vlaneseq
        %v331 = vshrl.u32 %v330, 7
        %v332 = vsub.s32 0, %v331
        %v333 = vrot.slane %v253, %v332
        %v334 = vlaneseq
        %v335 = vshrl.u32 %v334, 7
        %v336 = vsub.s32 0, %v335
        %v337 = vrot.slane %v257, %v336
        %v338 = vmul.f32 %v188, %v277
        %v339 = vmul.f32 %v188, %v281
        %v340 = vmul.f32 %v188, %v285
        %v341 = vmul.f32 %v188, %v289
        %v342 = vmul.f32 %v188, %v293
        %v343 = vmul.f32 %v188, %v297
        %v344 = vmul.f32 %v188, %v301
        %v345 = vmul.f32 %v188, %v305
        %v346 = vmul.f32 %v188, %v309
        %v347 = vmul.f32 %v188, %v313
        %v348 = vmul.f32 %v188, %v317
        %v349 = vmul.f32 %v188, %v321
        %v350 = vmul.f32 %v188, %v325
        %v351 = vmul.f32 %v188, %v329
        %v352 = vmul.f32 %v188, %v333
        %v353 = vmul.f32 %v188, %v337
        %354 = vset.pattern.permute.xlu0 1
        %355 = vperm.xlu0 %354, %v184
        %v356 = vpop.permute.xlu0 %355
        %v358 = vlaneseq
        %v359 = vshrl.u32 %v358, 7
        %v360 = vsub.s32 1, %v359
        %v361 = vrot.slane %v180, %v360
        %v362 = vlaneseq
        %v363 = vshrl.u32 %v362, 7
        %v364 = vsub.s32 3, %v363
        %v365 = vrot.slane %v180, %v364
        %v366 = vlaneseq
        %v367 = vshrl.u32 %v366, 7
        %v368 = vsub.s32 5, %v367
        %v369 = vrot.slane %v180, %v368
        %v370 = vlaneseq
        %v371 = vshrl.u32 %v370, 7
        %v372 = vsub.s32 7, %v371
        %v373 = vrot.slane %v180, %v372
        %v374 = vlaneseq
        %v375 = vshrl.u32 %v374, 7
        %v376 = vsub.s32 1, %v375
        %v377 = vrot.slane %v181, %v376
        %v378 = vlaneseq
        %v379 = vshrl.u32 %v378, 7
        %v380 = vsub.s32 3, %v379
        %v381 = vrot.slane %v181, %v380
        %v382 = vlaneseq
        %v383 = vshrl.u32 %v382, 7
        %v384 = vsub.s32 5, %v383
        %v385 = vrot.slane %v181, %v384
        %v386 = vlaneseq
        %v387 = vshrl.u32 %v386, 7
        %v388 = vsub.s32 7, %v387
        %v389 = vrot.slane %v181, %v388
        %v390 = vlaneseq
        %v391 = vshrl.u32 %v390, 7
        %v392 = vsub.s32 1, %v391
        %v393 = vrot.slane %v182, %v392
        %v394 = vlaneseq
        %v395 = vshrl.u32 %v394, 7
        %v396 = vsub.s32 3, %v395
        %v397 = vrot.slane %v182, %v396
        %v398 = vlaneseq
        %v399 = vshrl.u32 %v398, 7
        %v400 = vsub.s32 5, %v399
        %v401 = vrot.slane %v182, %v400
        %v402 = vlaneseq
        %v403 = vshrl.u32 %v402, 7
        %v404 = vsub.s32 7, %v403
        %v405 = vrot.slane %v182, %v404
        %v406 = vlaneseq
        %v407 = vshrl.u32 %v406, 7
        %v408 = vsub.s32 1, %v407
        %v409 = vrot.slane %v183, %v408
        %v410 = vlaneseq
        %v411 = vshrl.u32 %v410, 7
        %v412 = vsub.s32 3, %v411
        %v413 = vrot.slane %v183, %v412
        %v414 = vlaneseq
        %v415 = vshrl.u32 %v414, 7
        %v416 = vsub.s32 5, %v415
        %v417 = vrot.slane %v183, %v416
        %v418 = vlaneseq
        %v419 = vshrl.u32 %v418, 7
        %v420 = vsub.s32 7, %v419
        %v421 = vrot.slane %v183, %v420
        %v438 = vlaneseq
        %v439 = vshrl.u32 %v438, 7
        %v440 = vsub.s32 1, %v439
        %v441 = vrot.slane %v361, %v440
        %v442 = vlaneseq
        %v443 = vshrl.u32 %v442, 7
        %v444 = vsub.s32 1, %v443
        %v445 = vrot.slane %v365, %v444
        %v446 = vlaneseq
        %v447 = vshrl.u32 %v446, 7
        %v448 = vsub.s32 1, %v447
        %v449 = vrot.slane %v369, %v448
        %v450 = vlaneseq
        %v451 = vshrl.u32 %v450, 7
        %v452 = vsub.s32 1, %v451
        %v453 = vrot.slane %v373, %v452
        %v454 = vlaneseq
        %v455 = vshrl.u32 %v454, 7
        %v456 = vsub.s32 1, %v455
        %v457 = vrot.slane %v377, %v456
        %v458 = vlaneseq
        %v459 = vshrl.u32 %v458, 7
        %v460 = vsub.s32 1, %v459
        %v461 = vrot.slane %v381, %v460
        %v462 = vlaneseq
        %v463 = vshrl.u32 %v462, 7
        %v464 = vsub.s32 1, %v463
        %v465 = vrot.slane %v385, %v464
        %v466 = vlaneseq
        %v467 = vshrl.u32 %v466, 7
        %v468 = vsub.s32 1, %v467
        %v469 = vrot.slane %v389, %v468
        %v470 = vlaneseq
        %v471 = vshrl.u32 %v470, 7
        %v472 = vsub.s32 1, %v471
        %v473 = vrot.slane %v393, %v472
        %v474 = vlaneseq
        %v475 = vshrl.u32 %v474, 7
        %v476 = vsub.s32 1, %v475
        %v477 = vrot.slane %v397, %v476
        %v478 = vlaneseq
        %v479 = vshrl.u32 %v478, 7
        %v480 = vsub.s32 1, %v479
        %v481 = vrot.slane %v401, %v480
        %v482 = vlaneseq
        %v483 = vshrl.u32 %v482, 7
        %v484 = vsub.s32 1, %v483
        %v485 = vrot.slane %v405, %v484
        %v486 = vlaneseq
        %v487 = vshrl.u32 %v486, 7
        %v488 = vsub.s32 1, %v487
        %v489 = vrot.slane %v409, %v488
        %v490 = vlaneseq
        %v491 = vshrl.u32 %v490, 7
        %v492 = vsub.s32 1, %v491
        %v493 = vrot.slane %v413, %v492
        %v494 = vlaneseq
        %v495 = vshrl.u32 %v494, 7
        %v496 = vsub.s32 1, %v495
        %v497 = vrot.slane %v417, %v496
        %v498 = vlaneseq
        %v499 = vshrl.u32 %v498, 7
        %v500 = vsub.s32 1, %v499
        %v501 = vrot.slane %v421, %v500
        %v502 = vmul.f32 %v356, %v441
        %v503 = vmul.f32 %v356, %v445
        %v504 = vmul.f32 %v356, %v449
        %v505 = vmul.f32 %v356, %v453
        %v506 = vmul.f32 %v356, %v457
        %v507 = vmul.f32 %v356, %v461
        %v508 = vmul.f32 %v356, %v465
        %v509 = vmul.f32 %v356, %v469
        %v510 = vmul.f32 %v356, %v473
        %v511 = vmul.f32 %v356, %v477
        %v512 = vmul.f32 %v356, %v481
        %v513 = vmul.f32 %v356, %v485
        %v514 = vmul.f32 %v356, %v489
        %v515 = vmul.f32 %v356, %v493
        %v516 = vmul.f32 %v356, %v497
        %v517 = vmul.f32 %v356, %v501
        %s518 = scalar_lea.vmem %s0, 8
        %v519 = vld [vmem:[%s518] sm:$0xff]
        %521 = vset.pattern.permute.xlu0 0
        %522 = vperm.xlu0 %521, %v519
        %v523 = vpop.permute.xlu0 %522
        %v525 = vmul.f32 %v523, %v277
        %v526 = vmul.f32 %v523, %v281
        %v527 = vmul.f32 %v523, %v285
        %v528 = vmul.f32 %v523, %v289
        %v529 = vmul.f32 %v523, %v293
        %v530 = vmul.f32 %v523, %v297
        %v531 = vmul.f32 %v523, %v301
        %v532 = vmul.f32 %v523, %v305
        %v533 = vmul.f32 %v523, %v309
        %v534 = vmul.f32 %v523, %v313
        %v535 = vmul.f32 %v523, %v317
        %v536 = vmul.f32 %v523, %v321
        %v537 = vmul.f32 %v523, %v325
        %v538 = vmul.f32 %v523, %v329
        %v539 = vmul.f32 %v523, %v333
        %v540 = vmul.f32 %v523, %v337
        %541 = vset.pattern.permute.xlu0 1
        %542 = vperm.xlu0 %541, %v519
        %v543 = vpop.permute.xlu0 %542
        %v545 = vmul.f32 %v543, %v441
        %v546 = vmul.f32 %v543, %v445
        %v547 = vmul.f32 %v543, %v449
        %v548 = vmul.f32 %v543, %v453
        %v549 = vmul.f32 %v543, %v457
        %v550 = vmul.f32 %v543, %v461
        %v551 = vmul.f32 %v543, %v465
        %v552 = vmul.f32 %v543, %v469
        %v553 = vmul.f32 %v543, %v473
        %v554 = vmul.f32 %v543, %v477
        %v555 = vmul.f32 %v543, %v481
        %v556 = vmul.f32 %v543, %v485
        %v557 = vmul.f32 %v543, %v489
        %v558 = vmul.f32 %v543, %v493
        %v559 = vmul.f32 %v543, %v497
        %v560 = vmul.f32 %v543, %v501
        %s561 = scalar_lea.vmem %s0, 16
        %v562 = vld [vmem:[%s561] sm:$0xff]
        %564 = vset.pattern.permute.xlu0 0
        %565 = vperm.xlu0 %564, %v562
        %v566 = vpop.permute.xlu0 %565
        %v568 = vmul.f32 %v566, %v277
        %v569 = vmul.f32 %v566, %v281
        %v570 = vmul.f32 %v566, %v285
        %v571 = vmul.f32 %v566, %v289
        %v572 = vmul.f32 %v566, %v293
        %v573 = vmul.f32 %v566, %v297
        %v574 = vmul.f32 %v566, %v301
        %v575 = vmul.f32 %v566, %v305
        %v576 = vmul.f32 %v566, %v309
        %v577 = vmul.f32 %v566, %v313
        %v578 = vmul.f32 %v566, %v317
        %v579 = vmul.f32 %v566, %v321
        %v580 = vmul.f32 %v566, %v325
        %v581 = vmul.f32 %v566, %v329
        %v582 = vmul.f32 %v566, %v333
        %v583 = vmul.f32 %v566, %v337
        %584 = vset.pattern.permute.xlu0 1
        %585 = vperm.xlu0 %584, %v562
        %v586 = vpop.permute.xlu0 %585
        %v588 = vmul.f32 %v586, %v441
        %v589 = vmul.f32 %v586, %v445
        %v590 = vmul.f32 %v586, %v449
        %v591 = vmul.f32 %v586, %v453
        %v592 = vmul.f32 %v586, %v457
        %v593 = vmul.f32 %v586, %v461
        %v594 = vmul.f32 %v586, %v465
        %v595 = vmul.f32 %v586, %v469
        %v596 = vmul.f32 %v586, %v473
        %v597 = vmul.f32 %v586, %v477
        %v598 = vmul.f32 %v586, %v481
        %v599 = vmul.f32 %v586, %v485
        %v600 = vmul.f32 %v586, %v489
        %v601 = vmul.f32 %v586, %v493
        %v602 = vmul.f32 %v586, %v497
        %v603 = vmul.f32 %v586, %v501
        %v604 = vadd.f32 %v338, %v502
        %v605 = vadd.f32 %v339, %v503
        %v606 = vadd.f32 %v340, %v504
        %v607 = vadd.f32 %v341, %v505
        %v608 = vadd.f32 %v342, %v506
        %v609 = vadd.f32 %v343, %v507
        %v610 = vadd.f32 %v344, %v508
        %v611 = vadd.f32 %v345, %v509
        %v612 = vadd.f32 %v346, %v510
        %v613 = vadd.f32 %v347, %v511
        %v614 = vadd.f32 %v348, %v512
        %v615 = vadd.f32 %v349, %v513
        %v616 = vadd.f32 %v350, %v514
        %v617 = vadd.f32 %v351, %v515
        %v618 = vadd.f32 %v352, %v516
        %v619 = vadd.f32 %v353, %v517
        %v620 = vadd.f32 %v525, %v545
        %v621 = vadd.f32 %v526, %v546
        %v622 = vadd.f32 %v527, %v547
        %v623 = vadd.f32 %v528, %v548
        %v624 = vadd.f32 %v529, %v549
        %v625 = vadd.f32 %v530, %v550
        %v626 = vadd.f32 %v531, %v551
        %v627 = vadd.f32 %v532, %v552
        %v628 = vadd.f32 %v533, %v553
        %v629 = vadd.f32 %v534, %v554
        %v630 = vadd.f32 %v535, %v555
        %v631 = vadd.f32 %v536, %v556
        %v632 = vadd.f32 %v537, %v557
        %v633 = vadd.f32 %v538, %v558
        %v634 = vadd.f32 %v539, %v559
        %v635 = vadd.f32 %v540, %v560
        %v636 = vadd.f32 %v568, %v588
        %v637 = vadd.f32 %v569, %v589
        %v638 = vadd.f32 %v570, %v590
        %v639 = vadd.f32 %v571, %v591
        %v640 = vadd.f32 %v572, %v592
        %v641 = vadd.f32 %v573, %v593
        %v642 = vadd.f32 %v574, %v594
        %v643 = vadd.f32 %v575, %v595
        %v644 = vadd.f32 %v576, %v596
        %v645 = vadd.f32 %v577, %v597
        %v646 = vadd.f32 %v578, %v598
        %v647 = vadd.f32 %v579, %v599
        %v648 = vadd.f32 %v580, %v600
        %v649 = vadd.f32 %v581, %v601
        %v650 = vadd.f32 %v582, %v602
        %v651 = vadd.f32 %v583, %v603
        %v652 = vadd.f32 %v604, %v620
        %v653 = vadd.f32 %v605, %v621
        %v654 = vadd.f32 %v606, %v622
        %v655 = vadd.f32 %v607, %v623
        %v656 = vadd.f32 %v608, %v624
        %v657 = vadd.f32 %v609, %v625
        %v658 = vadd.f32 %v610, %v626
        %v659 = vadd.f32 %v611, %v627
        %v660 = vadd.f32 %v612, %v628
        %v661 = vadd.f32 %v613, %v629
        %v662 = vadd.f32 %v614, %v630
        %v663 = vadd.f32 %v615, %v631
        %v664 = vadd.f32 %v616, %v632
        %v665 = vadd.f32 %v617, %v633
        %v666 = vadd.f32 %v618, %v634
        %v667 = vadd.f32 %v619, %v635
        %v668 = vadd.f32 %v652, %v636
        %v669 = vadd.f32 %v653, %v637
        %v670 = vadd.f32 %v654, %v638
        %v671 = vadd.f32 %v655, %v639
        %v672 = vadd.f32 %v656, %v640
        %v673 = vadd.f32 %v657, %v641
        %v674 = vadd.f32 %v658, %v642
        %v675 = vadd.f32 %v659, %v643
        %v676 = vadd.f32 %v660, %v644
        %v677 = vadd.f32 %v661, %v645
        %v678 = vadd.f32 %v662, %v646
        %v679 = vadd.f32 %v663, %v647
        %v680 = vadd.f32 %v664, %v648
        %v681 = vadd.f32 %v665, %v649
        %v682 = vadd.f32 %v666, %v650
        %v683 = vadd.f32 %v667, %v651
        %684 = vst [vmem:[%s177] sm:$0xff] %v668
        %685 = vst [vmem:[%s177 + $0x8] sm:$0xff] %v669
        %686 = vst [vmem:[%s177 + $0x10] sm:$0xff] %v670
        %687 = vst [vmem:[%s177 + $0x18] sm:$0xff] %v671
        %688 = vst [vmem:[%s177 + $0x20] sm:$0xff] %v672
        %689 = vst [vmem:[%s177 + $0x28] sm:$0xff] %v673
        %690 = vst [vmem:[%s177 + $0x30] sm:$0xff] %v674
        %691 = vst [vmem:[%s177 + $0x38] sm:$0xff] %v675
        %692 = vst [vmem:[%s177 + $0x40] sm:$0xff] %v676
        %693 = vst [vmem:[%s177 + $0x48] sm:$0xff] %v677
        %694 = vst [vmem:[%s177 + $0x50] sm:$0xff] %v678
        %695 = vst [vmem:[%s177 + $0x58] sm:$0xff] %v679
        %696 = vst [vmem:[%s177 + $0x60] sm:$0xff] %v680
        %697 = vst [vmem:[%s177 + $0x68] sm:$0xff] %v681
        %698 = vst [vmem:[%s177 + $0x70] sm:$0xff] %v682
        %699 = vst [vmem:[%s177 + $0x78] sm:$0xff] %v683
        %s700 = sand.u32 %s90, 1
        %s701 = scalar_lea.sflag [#allocation4], %s700
        %s702 = sand.u32 %s90, 1
        %s703 = smul.addr %s702, 128
        %s704 = scalar_lea.vmem [#allocation5], %s703
        // Predicated region
        $region33: #{tpu_custom_call.1} parent=27 // pred_check
          %p705 = pneg %p100
        $region34: #{tpu_custom_call.1} parent=27 // pred_check_branch
          %707 = sbr.rel (%p705) target = $region36
        $region35: #{tpu_custom_call.1} parent=27 // pred_region
          %s708 = smul.u32 16, %s24
          %s710 = ssub.s32 2048, 2048
          %711 = vsyncadd %s701, %s710
          %s712 = smul.addr %s23, 16
          %s713 = sadd.s32 %s708, %s712
          %s714 = smul.addr %s713, 128
          %s715 = scalar_lea.hbm %s2, %s714
          %s717 = sshll.u32 %s704, 4
          %s718 = int_to_ptr.vmem [resolvable:$true] %s717
          %720 = dma.vmem_to_hbm [thread:$0]  %s718, 2048, %s715, %s701
        $region36: #{tpu_custom_call.1} parent=27 // pred_fallthru
          _
      $region28: #{tpu_custom_call.1} parent=5 // pred_fallthru
        _
      %p721 = scmp.le.s32.totalorder 2, %s14
      // Predicated region
      $region37: #{tpu_custom_call.1} parent=5 // pred_check
        %p722 = pneg %p721
      $region38: #{tpu_custom_call.1} parent=5 // pred_check_branch
        %724 = sbr.rel (%p722) target = $region40
      $region39: #{tpu_custom_call.1} parent=5 // pred_region
        %s725 = ssub.s32 %s14, 2
        // Predicated region
        $region41: #{tpu_custom_call.1} parent=39 // pred_check
          %p726 = pneg %p106
        $region42: #{tpu_custom_call.1} parent=39 // pred_check_branch
          %728 = sbr.rel (%p726) target = $region44
        $region43: #{tpu_custom_call.1} parent=39 // pred_region
          %s729 = sand.u32 %s91, 1
          %s730 = scalar_lea.sflag [#allocation4], %s729
          %s731 = sand.u32 %s91, 1
          %s732 = smul.addr %s731, 128
          %s733 = scalar_lea.vmem [#allocation5], %s732
          %734 = dma.done %s730, 2048
        $region44: #{tpu_custom_call.1} parent=39 // pred_fallthru
          _
      $region40: #{tpu_custom_call.1} parent=5 // pred_fallthru
        _
    $region6: #{tpu_custom_call.1} parent=1 // loop_footer
      %s18 = sadd.s32 1, %s14
    $region7: #{tpu_custom_call.1} parent=1 // loop_footer_branch
      %13 = sbr.rel target = $region3
    $region8: #{tpu_custom_call.1} parent=1 // loop_exit
      _
    %735 = vsyncpa [#allocation3], 1
    %s736 = scalar_lea.sflag [#allocation3], 1
    %737 = vsyncpa %s736, 1
    %738 = vsyncpa [#allocation4], 1
    %s739 = scalar_lea.sflag [#allocation4], 1
    %740 = vsyncpa %s739, 1

</llo_original>
